<compile_context>
chip_gen: v7x
topology: tpu7x:2x2x1
jax: 0.10.0
libtpu: 0.0.40
codegen_flags: <defaults>
</compile_context>

<pallas_src>
import jax
import jax.numpy as jnp
from jax.experimental import pallas as pl
from jax.experimental.pallas import tpu as pltpu


def _tv_kernel(x_ref, h_tv_ref, w_tv_ref):
    # x_ref: (P, H, W) block of spatial planes (plane axis = fused B*C).
    x = x_ref[...].astype(jnp.float32)

    # Diffs along H (axis 1) and W (axis 2); plane boundaries are never crossed.
    dh = x[:, 1:, :] - x[:, :-1, :]
    dw = x[:, :, 1:] - x[:, :, :-1]

    # Per-block partial sums -> this block's own output slot (no serial RMW).
    h_tv_ref[0, 0] = jnp.sum(dh * dh)
    w_tv_ref[0, 0] = jnp.sum(dw * dw)


def tv_loss(x, tv_loss_weight: float = 1.0):
    """x: (B, C, H, W) array. Returns scalar TV loss matching the PyTorch module."""
    B, C, H, W = x.shape
    BC = B * C
    x_flat = x.reshape(BC, H, W)

    # Choose planes-per-block P so one input block is <= ~4 MiB; with double
    # buffering that is <= ~8 MiB of VMEM -> fits every generation's scoped
    # limit (v5e 16 MiB default, v6e 32 MiB, v7x 32 MiB of 64 MiB physical).
    itemsize = jnp.dtype(x_flat.dtype).itemsize
    plane_bytes = max(H * W * itemsize, 1)
    per_buffer_budget = 4 * 1024 * 1024
    P = int(max(1, min(BC, per_buffer_budget // plane_bytes)))

    num_blocks = pl.cdiv(BC, P)
    padded = num_blocks * P
    if padded != BC:
        # Ragged tail: pad with all-zero planes; a zero plane contributes
        # exactly 0 to both TV sums since diffs never cross plane boundaries.
        x_flat = jnp.pad(x_flat, ((0, padded - BC), (0, 0), (0, 0)))

    # Advisory cost hint so XLA schedules around this mem-bound call sensibly.
    cost = pl.CostEstimate(
        flops=6 * BC * H * W,
        transcendentals=0,
        bytes_accessed=padded * plane_bytes + 2 * num_blocks * 4,
    )

    h_parts, w_parts = pl.pallas_call(
        _tv_kernel,
        out_shape=(
            jax.ShapeDtypeStruct((num_blocks, 1), jnp.float32),
            jax.ShapeDtypeStruct((num_blocks, 1), jnp.float32),
        ),
        grid_spec=pltpu.PrefetchScalarGridSpec(
            num_scalar_prefetch=0,
            grid=(num_blocks,),
            in_specs=[
                pl.BlockSpec((P, H, W), lambda i: (i, 0, 0)),
            ],
            out_specs=[
                pl.BlockSpec((1, 1), lambda i: (i, 0), memory_space=pltpu.SMEM),
                pl.BlockSpec((1, 1), lambda i: (i, 0), memory_space=pltpu.SMEM),
            ],
        ),
        compiler_params=pltpu.CompilerParams(
            dimension_semantics=("parallel",),   # independent blocks -> megacore OK
            vmem_limit_bytes=32 * 1024 * 1024,   # safe on v5e/v6e/v7x
        ),
        cost_estimate=cost,
    )(x_flat)

    h_tv = jnp.sum(h_parts)
    w_tv = jnp.sum(w_parts)

    count_h = C * (H - 1) * W
    count_w = C * H * (W - 1)
    # NOTE: H == 1 or W == 1 divides by zero, matching the PyTorch module.
    return tv_loss_weight * 2.0 * (h_tv / count_h + w_tv / count_w) / B


def tv_loss_ref(x, tv_loss_weight: float = 1.0):
    """Pure-JAX reference identical to the PyTorch forward."""
    B, C, H, W = x.shape
    count_h = C * (H - 1) * W
    count_w = C * H * (W - 1)
    h_tv = jnp.sum((x[:, :, 1:, :] - x[:, :, : H - 1, :]) ** 2)
    w_tv = jnp.sum((x[:, :, :, 1:] - x[:, :, :, : W - 1]) ** 2)
    return tv_loss_weight * 2.0 * (h_tv / count_h + w_tv / count_w) / B


if __name__ == "__main__":
    key = jax.random.PRNGKey(0)
    x = jax.random.normal(key, (2, 4, 16, 16), dtype=jnp.float32)

    out = jax.block_until_ready(tv_loss(x, tv_loss_weight=1.0))
    ref = tv_loss_ref(x, tv_loss_weight=1.0)
    assert jnp.allclose(out, ref, rtol=1e-5, atol=1e-5), (out, ref)

    print("KERNEL_OK")
</pallas_src>

<mosaic_0001>
module attributes {stable_mosaic.version = 11 : i64} {
  func.func @_tv_kernel(%arg0: i32, %arg1: memref<8x16x16xf32, #tpu.memory_space<vmem>>, %arg2: memref<1x1xf32, #tpu.memory_space<smem>>, %arg3: memref<1x1xf32, #tpu.memory_space<smem>>) attributes {dimension_semantics = [#tpu.dimension_semantics<parallel>], iteration_bounds = array<i64: 1>, scalar_prefetch = 0 : i64, scratch_operands = 0 : i64, tpu.core_type = #tpu.core_type<tc>, window_params = [{transform_indices = @transform_0, window_bounds = array<i64: 8, 16, 16>}, {transform_indices = @transform_1, window_bounds = array<i64: 1, 1>}, {transform_indices = @transform_2, window_bounds = array<i64: 1, 1>}]} {
    %c0 = arith.constant 0 : index
    %c0_0 = arith.constant 0 : index
    %c0_1 = arith.constant 0 : index
    %0 = vector.load %arg1[%c0, %c0_0, %c0_1] : memref<8x16x16xf32, #tpu.memory_space<vmem>>, vector<8x16x16xf32>
    %1 = vector.extract_strided_slice %0 {offsets = [0, 1, 0], sizes = [8, 15, 16], strides = [1, 1, 1]} : vector<8x16x16xf32> to vector<8x15x16xf32>
    %2 = vector.extract_strided_slice %0 {offsets = [0, 0, 0], sizes = [8, 15, 16], strides = [1, 1, 1]} : vector<8x16x16xf32> to vector<8x15x16xf32>
    %3 = arith.subf %1, %2 : vector<8x15x16xf32>
    %4 = vector.extract_strided_slice %0 {offsets = [0, 0, 1], sizes = [8, 16, 15], strides = [1, 1, 1]} : vector<8x16x16xf32> to vector<8x16x15xf32>
    %5 = vector.extract_strided_slice %0 {offsets = [0, 0, 0], sizes = [8, 16, 15], strides = [1, 1, 1]} : vector<8x16x16xf32> to vector<8x16x15xf32>
    %6 = arith.subf %4, %5 : vector<8x16x15xf32>
    %7 = arith.mulf %3, %3 : vector<8x15x16xf32>
    %8 = vector.shape_cast %7 : vector<8x15x16xf32> to vector<1x8x15x16xf32>
    %cst = arith.constant dense<0.000000e+00> : vector<1xf32>
    %9 = vector.multi_reduction <add>, %8, %cst [1, 2, 3] : vector<1x8x15x16xf32> to vector<1xf32>
    %10 = vector.shape_cast %9 : vector<1xf32> to vector<1x1x1x1xf32>
    %11 = vector.extract %10[0, 0, 0, 0] : f32 from vector<1x1x1x1xf32>
    %c0_2 = arith.constant 0 : index
    %c0_3 = arith.constant 0 : index
    %12 = memref.load %arg2[%c0_2, %c0_3] : memref<1x1xf32, #tpu.memory_space<smem>>
    memref.store %11, %arg2[%c0_2, %c0_3] : memref<1x1xf32, #tpu.memory_space<smem>>
    %13 = arith.mulf %6, %6 : vector<8x16x15xf32>
    %14 = vector.shape_cast %13 : vector<8x16x15xf32> to vector<1x8x16x15xf32>
    %cst_4 = arith.constant dense<0.000000e+00> : vector<1xf32>
    %15 = vector.multi_reduction <add>, %14, %cst_4 [1, 2, 3] : vector<1x8x16x15xf32> to vector<1xf32>
    %16 = vector.shape_cast %15 : vector<1xf32> to vector<1x1x1x1xf32>
    %17 = vector.extract %16[0, 0, 0, 0] : f32 from vector<1x1x1x1xf32>
    %c0_5 = arith.constant 0 : index
    %c0_6 = arith.constant 0 : index
    %18 = memref.load %arg3[%c0_5, %c0_6] : memref<1x1xf32, #tpu.memory_space<smem>>
    memref.store %17, %arg3[%c0_5, %c0_6] : memref<1x1xf32, #tpu.memory_space<smem>>
    return
  }
  func.func @transform_0(%arg0: i32) -> (i32, i32, i32) {
    %c0_i32 = arith.constant 0 : i32
    %c0_i32_0 = arith.constant 0 : i32
    %c0_i32_1 = arith.constant 0 : i32
    return %arg0, %c0_i32, %c0_i32_0 : i32, i32, i32
  }
  func.func @transform_1(%arg0: i32) -> (i32, i32) {
    %c0_i32 = arith.constant 0 : i32
    %c0_i32_0 = arith.constant 0 : i32
    return %arg0, %c0_i32 : i32, i32
  }
  func.func @transform_2(%arg0: i32) -> (i32, i32) {
    %c0_i32 = arith.constant 0 : i32
    %c0_i32_0 = arith.constant 0 : i32
    return %arg0, %c0_i32 : i32, i32
  }
}

</mosaic_0001>

<llo_original>
// kernel: tpu_custom_call.1
$region0: #{tpu_custom_call.1}
  #allocation0 [shape = 'u32[]', space=smem, size = 0x4, offset = 0x4, fixed_abs, tag = 'smem constant byte address 0x4 - core index']
  #allocation1 [shape = 'u32[144,128]{1,0:T(1,128)}', space=vmem, size = 0x12000, scoped, tag = 'internal scratch']
  %s0 = inlined_call_operand.hbm [shape: f32[8,16,16], index: 0, kind: input, shape index: {}]
  %s1 = inlined_call_operand.hbm [shape: f32[1,1], index: 1, kind: output, shape index: {0}]
  %s2 = inlined_call_operand.hbm [shape: f32[1,1], index: 2, kind: output, shape index: {1}]
  %3 = xla_tuple %s1, %s2
  %s4 = sld [smem:[#allocation0]]
  $region26: #{tpu_custom_call.1} parent=0
    _
  %s6 = ssub.s32 1, %s4
  %s7 = scalar_select 0, %s6, %s4
  $region1: #{tpu_custom_call.1} parent=0
    #allocation2 [shape = 'u8[65536]{0}', space=vmem, size = 0x10000, scoped, tag = 'input window, operand 0, single buffered']
    #allocation3 [shape = 's32[1]{0}', space=sflag, size = 0x4, scoped, tag = 'scoped memory for tpu_custom_call.1']
    #allocation4 [shape = 's32[1]{0}', space=sflag, size = 0x4, scoped, tag = 'scoped memory for tpu_custom_call.1']
    #allocation5 [shape = 'u8[512]{0}', space=smem, size = 0x200, scoped, tag = 'output window, operand 0, single buffered']
    #allocation6 [shape = 'u8[512]{0}', space=smem, size = 0x200, scoped, tag = 'output window, operand 1, single buffered']
    #allocation7 [shape = 's32[1]{0}', space=sflag, size = 0x4, scoped, tag = 'scoped memory for tpu_custom_call.1']
    %8 = vsyncpa [#allocation3], 0
    %9 = vsyncpa [#allocation4], 0
    %10 = vsyncpa [#allocation7], 0
    // Predicated region
    $region2: #{tpu_custom_call.1} parent=1 // pred_check
      _
    $region3: #{tpu_custom_call.1} parent=1 // pred_check_branch
      %12 = sbr.rel (0) target = $region5
    $region4: #{tpu_custom_call.1} parent=1 // pred_region
      %s14 = ssub.s32 2048, 2048
      %15 = vsyncadd [#allocation3], %s14
      %s16 = sshll.u32 [#allocation2], 4
      %s17 = int_to_ptr.vmem [resolvable:$true] %s16
      %22 = dma.hbm_to_vmem [thread:$0]  %s0, 2048, %s17, [#allocation3], 128, 128, 8
    $region5: #{tpu_custom_call.1} parent=1 // pred_fallthru
      _
    // Predicated region
    $region6: #{tpu_custom_call.1} parent=1 // pred_check
      _
    $region7: #{tpu_custom_call.1} parent=1 // pred_check_branch
      %24 = sbr.rel (0) target = $region9
    $region8: #{tpu_custom_call.1} parent=1 // pred_region
      %25 = dma.done [#allocation3], 2048
    $region9: #{tpu_custom_call.1} parent=1 // pred_fallthru
      _
    %v26 = vld [vmem:[#allocation2] sm:$0xff]
    %v27 = vld [vmem:[#allocation2 + $0x8] sm:$0xff]
    %v28 = vld [vmem:[#allocation2 + $0x10] sm:$0xff]
    %v29 = vld [vmem:[#allocation2 + $0x18] sm:$0xff]
    %v30 = vld [vmem:[#allocation2 + $0x20] sm:$0xff]
    %v31 = vld [vmem:[#allocation2 + $0x28] sm:$0xff]
    %v32 = vld [vmem:[#allocation2 + $0x30] sm:$0xff]
    %v33 = vld [vmem:[#allocation2 + $0x38] sm:$0xff]
    %v34 = vld [vmem:[#allocation2 + $0x40] sm:$0xff]
    %v35 = vld [vmem:[#allocation2 + $0x48] sm:$0xff]
    %v36 = vld [vmem:[#allocation2 + $0x50] sm:$0xff]
    %v37 = vld [vmem:[#allocation2 + $0x58] sm:$0xff]
    %v38 = vld [vmem:[#allocation2 + $0x60] sm:$0xff]
    %v39 = vld [vmem:[#allocation2 + $0x68] sm:$0xff]
    %v40 = vld [vmem:[#allocation2 + $0x70] sm:$0xff]
    %v41 = vld [vmem:[#allocation2 + $0x78] sm:$0xff]
    %vm58 = vcmask 1040384
    %v59 = vrot.slane %v26, 7
    %v60 = vrot.slane %v27, 7
    %v61 = vsel %vm58, %v59, %v60
    %v62 = vrot.slane %v28, 7
    %v63 = vrot.slane %v29, 7
    %v64 = vsel %vm58, %v62, %v63
    %v65 = vrot.slane %v30, 7
    %v66 = vrot.slane %v31, 7
    %v67 = vsel %vm58, %v65, %v66
    %v68 = vrot.slane %v32, 7
    %v69 = vrot.slane %v33, 7
    %v70 = vsel %vm58, %v68, %v69
    %v71 = vrot.slane %v34, 7
    %v72 = vrot.slane %v35, 7
    %v73 = vsel %vm58, %v71, %v72
    %v74 = vrot.slane %v36, 7
    %v75 = vrot.slane %v37, 7
    %v76 = vsel %vm58, %v74, %v75
    %v77 = vrot.slane %v38, 7
    %v78 = vrot.slane %v39, 7
    %v79 = vsel %vm58, %v77, %v78
    %v80 = vrot.slane %v40, 7
    %v81 = vrot.slane %v41, 7
    %v82 = vsel %vm58, %v80, %v81
    %v99 = vsub.f32 %v26, %v59
    %v100 = vsub.f32 %v27, %v61
    %v101 = vsub.f32 %v28, %v62
    %v102 = vsub.f32 %v29, %v64
    %v103 = vsub.f32 %v30, %v65
    %v104 = vsub.f32 %v31, %v67
    %v105 = vsub.f32 %v32, %v68
    %v106 = vsub.f32 %v33, %v70
    %v107 = vsub.f32 %v34, %v71
    %v108 = vsub.f32 %v35, %v73
    %v109 = vsub.f32 %v36, %v74
    %v110 = vsub.f32 %v37, %v76
    %v111 = vsub.f32 %v38, %v77
    %v112 = vsub.f32 %v39, %v79
    %v113 = vsub.f32 %v40, %v80
    %v114 = vsub.f32 %v41, %v82
    %115 = vrot.lane.b32.xlu0 %v26, 1
    %v116 = vpop.permute.xlu0 %115
    %117 = vrot.lane.b32.xlu0 %v27, 1
    %v118 = vpop.permute.xlu0 %117
    %119 = vrot.lane.b32.xlu0 %v28, 1
    %v120 = vpop.permute.xlu0 %119
    %121 = vrot.lane.b32.xlu0 %v29, 1
    %v122 = vpop.permute.xlu0 %121
    %123 = vrot.lane.b32.xlu0 %v30, 1
    %v124 = vpop.permute.xlu0 %123
    %125 = vrot.lane.b32.xlu0 %v31, 1
    %v126 = vpop.permute.xlu0 %125
    %127 = vrot.lane.b32.xlu0 %v32, 1
    %v128 = vpop.permute.xlu0 %127
    %129 = vrot.lane.b32.xlu0 %v33, 1
    %v130 = vpop.permute.xlu0 %129
    %131 = vrot.lane.b32.xlu0 %v34, 1
    %v132 = vpop.permute.xlu0 %131
    %133 = vrot.lane.b32.xlu0 %v35, 1
    %v134 = vpop.permute.xlu0 %133
    %135 = vrot.lane.b32.xlu0 %v36, 1
    %v136 = vpop.permute.xlu0 %135
    %137 = vrot.lane.b32.xlu0 %v37, 1
    %v138 = vpop.permute.xlu0 %137
    %139 = vrot.lane.b32.xlu0 %v38, 1
    %v140 = vpop.permute.xlu0 %139
    %141 = vrot.lane.b32.xlu0 %v39, 1
    %v142 = vpop.permute.xlu0 %141
    %143 = vrot.lane.b32.xlu0 %v40, 1
    %v144 = vpop.permute.xlu0 %143
    %145 = vrot.lane.b32.xlu0 %v41, 1
    %v146 = vpop.permute.xlu0 %145
    %v163 = vsub.f32 %v26, %v116
    %v164 = vsub.f32 %v27, %v118
    %v165 = vsub.f32 %v28, %v120
    %v166 = vsub.f32 %v29, %v122
    %v167 = vsub.f32 %v30, %v124
    %v168 = vsub.f32 %v31, %v126
    %v169 = vsub.f32 %v32, %v128
    %v170 = vsub.f32 %v33, %v130
    %v171 = vsub.f32 %v34, %v132
    %v172 = vsub.f32 %v35, %v134
    %v173 = vsub.f32 %v36, %v136
    %v174 = vsub.f32 %v37, %v138
    %v175 = vsub.f32 %v38, %v140
    %v176 = vsub.f32 %v39, %v142
    %v177 = vsub.f32 %v40, %v144
    %v178 = vsub.f32 %v41, %v146
    %v179 = vmul.f32 %v99, %v99
    %v180 = vmul.f32 %v100, %v100
    %v181 = vmul.f32 %v101, %v101
    %v182 = vmul.f32 %v102, %v102
    %v183 = vmul.f32 %v103, %v103
    %v184 = vmul.f32 %v104, %v104
    %v185 = vmul.f32 %v105, %v105
    %v186 = vmul.f32 %v106, %v106
    %v187 = vmul.f32 %v107, %v107
    %v188 = vmul.f32 %v108, %v108
    %v189 = vmul.f32 %v109, %v109
    %v190 = vmul.f32 %v110, %v110
    %v191 = vmul.f32 %v111, %v111
    %v192 = vmul.f32 %v112, %v112
    %v193 = vmul.f32 %v113, %v113
    %v194 = vmul.f32 %v114, %v114
    %vm211 = vcmask 1046528
    %v212 = vrot.slane %v179, 1
    %v213 = vrot.slane %v180, 1
    %v214 = vsel %vm211, %v212, %v213
    %v215 = vrot.slane %v181, 1
    %v216 = vrot.slane %v182, 1
    %v217 = vsel %vm211, %v215, %v216
    %v218 = vrot.slane %v183, 1
    %v219 = vrot.slane %v184, 1
    %v220 = vsel %vm211, %v218, %v219
    %v221 = vrot.slane %v185, 1
    %v222 = vrot.slane %v186, 1
    %v223 = vsel %vm211, %v221, %v222
    %v224 = vrot.slane %v187, 1
    %v225 = vrot.slane %v188, 1
    %v226 = vsel %vm211, %v224, %v225
    %v227 = vrot.slane %v189, 1
    %v228 = vrot.slane %v190, 1
    %v229 = vsel %vm211, %v227, %v228
    %v230 = vrot.slane %v191, 1
    %v231 = vrot.slane %v192, 1
    %v232 = vsel %vm211, %v230, %v231
    %v233 = vrot.slane %v193, 1
    %v234 = vrot.slane %v194, 1
    %v235 = vsel %vm211, %v233, %v234
    %vm252 = vcmask 130048
    %v253 = vsel %vm252, %v214, 0.0
    %vm254 = vcmask 129024
    %v255 = vsel %vm254, %v213, 0.0
    %v256 = vadd.f32 %v253, %v255
    %v257 = vsel %vm252, %v217, 0.0
    %v258 = vadd.f32 %v256, %v257
    %v259 = vsel %vm254, %v216, 0.0
    %v260 = vadd.f32 %v258, %v259
    %v261 = vsel %vm252, %v220, 0.0
    %v262 = vadd.f32 %v260, %v261
    %v263 = vsel %vm254, %v219, 0.0
    %v264 = vadd.f32 %v262, %v263
    %v265 = vsel %vm252, %v223, 0.0
    %v266 = vadd.f32 %v264, %v265
    %v267 = vsel %vm254, %v222, 0.0
    %v268 = vadd.f32 %v266, %v267
    %v269 = vsel %vm252, %v226, 0.0
    %v270 = vadd.f32 %v268, %v269
    %v271 = vsel %vm254, %v225, 0.0
    %v272 = vadd.f32 %v270, %v271
    %v273 = vsel %vm252, %v229, 0.0
    %v274 = vadd.f32 %v272, %v273
    %v275 = vsel %vm254, %v228, 0.0
    %v276 = vadd.f32 %v274, %v275
    %v277 = vsel %vm252, %v232, 0.0
    %v278 = vadd.f32 %v276, %v277
    %v279 = vsel %vm254, %v231, 0.0
    %v280 = vadd.f32 %v278, %v279
    %v281 = vsel %vm252, %v235, 0.0
    %v282 = vadd.f32 %v280, %v281
    %v283 = vsel %vm254, %v234, 0.0
    %v284 = vadd.f32 %v282, %v283
    %285 = vadd.xlane.f32.xlu0 %v284
    %v286 = vpop.xlane.xlu0 %285
    %v287 = vrot.slane %v286, 4
    %v288 = vadd.f32 %v286, %v287
    %v289 = vrot.slane %v288, 2
    %v290 = vadd.f32 %v288, %v289
    %v291 = vrot.slane %v290, 1
    %v292 = vadd.f32 %v290, %v291
    %s293 = vtos %v292
    %s294 = scalar_lea.smem [#allocation5], 0
    %295 = sst [smem:[%s294]] %s293
    %v296 = vmul.f32 %v163, %v163
    %v297 = vmul.f32 %v164, %v164
    %v298 = vmul.f32 %v165, %v165
    %v299 = vmul.f32 %v166, %v166
    %v300 = vmul.f32 %v167, %v167
    %v301 = vmul.f32 %v168, %v168
    %v302 = vmul.f32 %v169, %v169
    %v303 = vmul.f32 %v170, %v170
    %v304 = vmul.f32 %v171, %v171
    %v305 = vmul.f32 %v172, %v172
    %v306 = vmul.f32 %v173, %v173
    %v307 = vmul.f32 %v174, %v174
    %v308 = vmul.f32 %v175, %v175
    %v309 = vmul.f32 %v176, %v176
    %v310 = vmul.f32 %v177, %v177
    %v311 = vmul.f32 %v178, %v178
    %328 = vrot.lane.b32.xlu0 %v296, 127
    %v329 = vpop.permute.xlu0 %328
    %330 = vrot.lane.b32.xlu0 %v297, 127
    %v331 = vpop.permute.xlu0 %330
    %332 = vrot.lane.b32.xlu0 %v298, 127
    %v333 = vpop.permute.xlu0 %332
    %334 = vrot.lane.b32.xlu0 %v299, 127
    %v335 = vpop.permute.xlu0 %334
    %336 = vrot.lane.b32.xlu0 %v300, 127
    %v337 = vpop.permute.xlu0 %336
    %338 = vrot.lane.b32.xlu0 %v301, 127
    %v339 = vpop.permute.xlu0 %338
    %340 = vrot.lane.b32.xlu0 %v302, 127
    %v341 = vpop.permute.xlu0 %340
    %342 = vrot.lane.b32.xlu0 %v303, 127
    %v343 = vpop.permute.xlu0 %342
    %344 = vrot.lane.b32.xlu0 %v304, 127
    %v345 = vpop.permute.xlu0 %344
    %346 = vrot.lane.b32.xlu0 %v305, 127
    %v347 = vpop.permute.xlu0 %346
    %348 = vrot.lane.b32.xlu0 %v306, 127
    %v349 = vpop.permute.xlu0 %348
    %350 = vrot.lane.b32.xlu0 %v307, 127
    %v351 = vpop.permute.xlu0 %350
    %352 = vrot.lane.b32.xlu0 %v308, 127
    %v353 = vpop.permute.xlu0 %352
    %354 = vrot.lane.b32.xlu0 %v309, 127
    %v355 = vpop.permute.xlu0 %354
    %356 = vrot.lane.b32.xlu0 %v310, 127
    %v357 = vpop.permute.xlu0 %356
    %358 = vrot.lane.b32.xlu0 %v311, 127
    %v359 = vpop.permute.xlu0 %358
    %vm376 = vcmask 121856
    %v377 = vsel %vm376, %v329, 0.0
    %v378 = vsel %vm376, %v331, 0.0
    %v379 = vadd.f32 %v377, %v378
    %v380 = vsel %vm376, %v333, 0.0
    %v381 = vadd.f32 %v379, %v380
    %v382 = vsel %vm376, %v335, 0.0
    %v383 = vadd.f32 %v381, %v382
    %v384 = vsel %vm376, %v337, 0.0
    %v385 = vadd.f32 %v383, %v384
    %v386 = vsel %vm376, %v339, 0.0
    %v387 = vadd.f32 %v385, %v386
    %v388 = vsel %vm376, %v341, 0.0
    %v389 = vadd.f32 %v387, %v388
    %v390 = vsel %vm376, %v343, 0.0
    %v391 = vadd.f32 %v389, %v390
    %v392 = vsel %vm376, %v345, 0.0
    %v393 = vadd.f32 %v391, %v392
    %v394 = vsel %vm376, %v347, 0.0
    %v395 = vadd.f32 %v393, %v394
    %v396 = vsel %vm376, %v349, 0.0
    %v397 = vadd.f32 %v395, %v396
    %v398 = vsel %vm376, %v351, 0.0
    %v399 = vadd.f32 %v397, %v398
    %v400 = vsel %vm376, %v353, 0.0
    %v401 = vadd.f32 %v399, %v400
    %v402 = vsel %vm376, %v355, 0.0
    %v403 = vadd.f32 %v401, %v402
    %v404 = vsel %vm376, %v357, 0.0
    %v405 = vadd.f32 %v403, %v404
    %v406 = vsel %vm376, %v359, 0.0
    %v407 = vadd.f32 %v405, %v406
    %408 = vadd.xlane.f32.xlu0 %v407
    %v409 = vpop.xlane.xlu0 %408
    %v410 = vrot.slane %v409, 4
    %v411 = vadd.f32 %v409, %v410
    %v412 = vrot.slane %v411, 2
    %v413 = vadd.f32 %v411, %v412
    %v414 = vrot.slane %v413, 1
    %v415 = vadd.f32 %v413, %v414
    %s416 = vtos %v415
    %s417 = scalar_lea.smem [#allocation6], 0
    %418 = sst [smem:[%s417]] %s416
    // Predicated region
    $region10: #{tpu_custom_call.1} parent=1 // pred_check
      _
    $region11: #{tpu_custom_call.1} parent=1 // pred_check_branch
      %420 = sbr.rel (0) target = $region13
    $region12: #{tpu_custom_call.1} parent=1 // pred_region
      %s422 = ssub.s32 16, 16
      %423 = vsyncadd [#allocation4], %s422
      %426 = dma.smem_to_hbm [#allocation5], 16, %s1, [#allocation4]
    $region13: #{tpu_custom_call.1} parent=1 // pred_fallthru
      _
    // Predicated region
    $region14: #{tpu_custom_call.1} parent=1 // pred_check
      _
    $region15: #{tpu_custom_call.1} parent=1 // pred_check_branch
      %428 = sbr.rel (0) target = $region17
    $region16: #{tpu_custom_call.1} parent=1 // pred_region
      %s430 = ssub.s32 16, 16
      %431 = vsyncadd [#allocation7], %s430
      %434 = dma.smem_to_hbm [#allocation6], 16, %s2, [#allocation7]
    $region17: #{tpu_custom_call.1} parent=1 // pred_fallthru
      _
    // Predicated region
    $region18: #{tpu_custom_call.1} parent=1 // pred_check
      _
    $region19: #{tpu_custom_call.1} parent=1 // pred_check_branch
      %436 = sbr.rel (0) target = $region21
    $region20: #{tpu_custom_call.1} parent=1 // pred_region
      %437 = dma.done [#allocation4], 16
    $region21: #{tpu_custom_call.1} parent=1 // pred_fallthru
      _
    // Predicated region
    $region22: #{tpu_custom_call.1} parent=1 // pred_check
      _
    $region23: #{tpu_custom_call.1} parent=1 // pred_check_branch
      %439 = sbr.rel (0) target = $region25
    $region24: #{tpu_custom_call.1} parent=1 // pred_region
      %440 = dma.done [#allocation7], 16
    $region25: #{tpu_custom_call.1} parent=1 // pred_fallthru
      _
    %441 = sfence
    %442 = vsyncpa [#allocation3], 1
    %443 = vsyncpa [#allocation4], 1
    %444 = vsyncpa [#allocation7], 1

</llo_original>
